<compile_context>
chip_gen: v7x
topology: tpu7x:2x2x1
jax: 0.10.0
libtpu: 0.0.40
codegen_flags: <defaults>
</compile_context>

<pallas_src>
import math
import functools

import jax
import jax.numpy as jnp
from jax.experimental import pallas as pl
from jax.experimental.pallas import tpu as pltpu


def _round_up(x, m):
    return (x + m - 1) // m * m


def _vmem_footprint(tm, tk, d_model_p, x_bytes, out_bytes, w_bytes):
    """Estimated VMEM bytes for the pipelined blocks + resident scratch."""
    x_buf = 2 * tm * d_model_p * x_bytes          # double-buffered x tile
    o_buf = 2 * tm * d_model_p * out_bytes        # double-buffered out tile
    acc = tm * d_model_p * 4                      # f32 accumulator scratch
    w_buf = 2 * 2 * d_model_p * tk * w_bytes      # w1 + w2 chunks, double-buffered
    small = 2 * (tk + 3 * d_model_p) * 4          # b1, b2, gamma, beta
    return x_buf + o_buf + acc + w_buf + small


def _ffn_kernel(x_ref, w1_ref, b1_ref, w2_ref, b2_ref, g_ref, beta_ref,
                o_ref, acc_ref, *, d_model, d_model_p):
    # Grid: (row tiles, d_ff chunks). The d_ff chunk axis is the reduction axis.
    k = pl.program_id(1)

    @pl.when(k == 0)
    def _():
        acc_ref[...] = jnp.zeros_like(acc_ref)

    # Linear 1 on this d_ff chunk: bf16 into the MXU, f32 out.
    xb = x_ref[...].astype(w1_ref.dtype)
    h = jnp.dot(xb, w1_ref[...], preferred_element_type=jnp.float32)
    h = h + b1_ref[...].astype(jnp.float32)

    # GELU (tanh approximation, matches the PyTorch GELU module exactly).
    # Elementwise, so applying it per d_ff chunk is valid.
    c = math.sqrt(2.0 / math.pi)
    h = 0.5 * h * (1.0 + jnp.tanh(c * (h + 0.044715 * h * h * h)))

    # Linear 2 partial sum: bf16 into the MXU, accumulated in f32.
    acc_ref[...] += jnp.dot(h.astype(w2_ref.dtype), w2_ref[...],
                            preferred_element_type=jnp.float32)

    @pl.when(k == pl.num_programs(1) - 1)
    def _():
        # bias2 + residual (residual stays in the input's native precision).
        y = (acc_ref[...]
             + b2_ref[...].astype(jnp.float32)
             + x_ref[...].astype(jnp.float32))

        # LayerNorm over the *real* d_model lanes only.  Padded lanes are
        # explicitly masked for both the mean and the variance, so correctness
        # does not depend on padded lanes of y being exactly zero.
        if d_model_p != d_model:
            lane = jax.lax.broadcasted_iota(jnp.int32, (1, d_model_p), 1)
            mask = (lane < d_model).astype(jnp.float32)
            y = y * mask
        inv_d = 1.0 / d_model
        mean = jnp.sum(y, axis=-1, keepdims=True) * inv_d
        diff = y - mean
        if d_model_p != d_model:
            diff = diff * mask
        var = jnp.sum(diff * diff, axis=-1, keepdims=True) * inv_d
        yn = diff * jax.lax.rsqrt(var + 1e-5)
        out = yn * g_ref[...].astype(jnp.float32) + beta_ref[...].astype(jnp.float32)
        o_ref[...] = out.astype(o_ref.dtype)


@functools.partial(jax.jit, static_argnames=("tm", "tk"))
def poswise_ffn(x, w1, b1, w2, b2, gamma, beta, *, tm=512, tk=1024):
    """x: (B, S, d_model). w1: (d_model, d_ff), w2: (d_ff, d_model)."""
    B, S, d_model = x.shape
    d_ff = w1.shape[1]
    M = B * S

    x_bytes = jnp.dtype(x.dtype).itemsize
    out_bytes = x_bytes
    w_dtype = jnp.bfloat16
    w_bytes = 2

    # Sublane pack of the row dimension depends on the input dtype.
    pack = {1: 32, 2: 16}.get(x_bytes, 8)

    # Lane-dense feature padding: 256-aligned for the v6e/v7x 2x256x256 MXU
    # when d_model is large enough, 128 minimum.
    d_model_p = _round_up(d_model, 256 if d_model > 128 else 128)
    d_ff_p = _round_up(d_ff, 128)

    # Row tile: large for weight reuse, but always >= 2 row tiles when M
    # allows (keeps both v7x TensorCores busy on the "parallel" axis).
    tm_full = _round_up(M, pack)
    tm_eff = min(tm, tm_full)
    if tm_eff >= tm_full and M > pack:
        tm_eff = _round_up(-(-M // 2), pack)

    # d_ff chunk: large to amortize per-grid-step overhead.
    tk_eff = min(tk, d_ff_p)

    # Explicit VMEM budget (v7x only has 64 MiB).  Shrink tk first, tm last.
    vmem_cap = 64 * 1024 * 1024
    try:
        vmem_cap = int(getattr(pltpu.get_tpu_info(), "vmem_capacity_bytes",
                               vmem_cap))
    except Exception:
        pass
    budget = int(vmem_cap * 0.70)        # tile footprint target, leaves headroom
    while (_vmem_footprint(tm_eff, tk_eff, d_model_p, x_bytes, out_bytes,
                           w_bytes) > budget and tk_eff > 256):
        tk_eff = max(256, _round_up(tk_eff // 2, 128))
    while (_vmem_footprint(tm_eff, tk_eff, d_model_p, x_bytes, out_bytes,
                           w_bytes) > budget and tm_eff > pack):
        tm_eff = max(pack, _round_up(tm_eff // 2, pack))

    d_ff_p = _round_up(d_ff_p, tk_eff)   # make tk divide the padded d_ff
    M_p = _round_up(M, tm_eff)
    vmem_limit = min(int(vmem_cap * 0.85), vmem_cap - 8 * 1024 * 1024)

    x2d = jnp.pad(x.reshape(M, d_model),
                  ((0, M_p - M), (0, d_model_p - d_model)))
    w1_p = jnp.pad(w1, ((0, d_model_p - d_model),
                        (0, d_ff_p - d_ff))).astype(w_dtype)
    b1_p = jnp.pad(b1, ((0, d_ff_p - d_ff),)).astype(jnp.float32).reshape(1, d_ff_p)
    w2_p = jnp.pad(w2, ((0, d_ff_p - d_ff),
                        (0, d_model_p - d_model))).astype(w_dtype)
    b2_p = jnp.pad(b2, ((0, d_model_p - d_model),)).astype(jnp.float32).reshape(1, d_model_p)
    g_p = jnp.pad(gamma, ((0, d_model_p - d_model),)).astype(jnp.float32).reshape(1, d_model_p)
    beta_p = jnp.pad(beta, ((0, d_model_p - d_model),)).astype(jnp.float32).reshape(1, d_model_p)

    grid = (M_p // tm_eff, d_ff_p // tk_eff)
    kernel = functools.partial(_ffn_kernel, d_model=d_model,
                               d_model_p=d_model_p)

    out2d = pl.pallas_call(
        kernel,
        out_shape=jax.ShapeDtypeStruct((M_p, d_model_p), x.dtype),
        grid_spec=pltpu.PrefetchScalarGridSpec(
            num_scalar_prefetch=0,
            grid=grid,
            in_specs=[
                pl.BlockSpec((tm_eff, d_model_p), lambda i, k: (i, 0)),    # x rows
                pl.BlockSpec((d_model_p, tk_eff), lambda i, k: (0, k)),    # w1 chunk
                pl.BlockSpec((1, tk_eff), lambda i, k: (0, k)),            # b1 chunk
                pl.BlockSpec((tk_eff, d_model_p), lambda i, k: (k, 0)),    # w2 chunk
                pl.BlockSpec((1, d_model_p), lambda i, k: (0, 0)),         # b2
                pl.BlockSpec((1, d_model_p), lambda i, k: (0, 0)),         # gamma
                pl.BlockSpec((1, d_model_p), lambda i, k: (0, 0)),         # beta
            ],
            out_specs=pl.BlockSpec((tm_eff, d_model_p), lambda i, k: (i, 0)),
            scratch_shapes=[pltpu.VMEM((tm_eff, d_model_p), jnp.float32)],
        ),
        compiler_params=pltpu.CompilerParams(
            dimension_semantics=("parallel", "arbitrary"),
            vmem_limit_bytes=vmem_limit,
        ),
    )(x2d, w1_p, b1_p, w2_p, b2_p, g_p, beta_p)

    return out2d[:M, :d_model].reshape(B, S, d_model)


def _reference(x, w1, b1, w2, b2, gamma, beta):
    c = math.sqrt(2.0 / math.pi)
    h = x @ w1 + b1
    h = 0.5 * h * (1.0 + jnp.tanh(c * (h + 0.044715 * h ** 3)))
    y = h @ w2 + b2 + x
    mean = jnp.mean(y, axis=-1, keepdims=True)
    var = jnp.mean((y - mean) ** 2, axis=-1, keepdims=True)
    return (y - mean) * jax.lax.rsqrt(var + 1e-5) * gamma + beta


if __name__ == "__main__":
    batch, seq, d_model, d_ff = 2, 8, 32, 64

    key = jax.random.PRNGKey(0)
    kx, k1, kb1, k2, kb2 = jax.random.split(key, 5)

    x = jax.random.normal(kx, (batch, seq, d_model), dtype=jnp.float32)

    # Deterministic "synthetic checkpoint": uniform init like nn.Linear defaults.
    bound1 = 1.0 / math.sqrt(d_model)
    w1 = jax.random.uniform(k1, (d_model, d_ff), jnp.float32, -bound1, bound1)
    b1 = jax.random.uniform(kb1, (d_ff,), jnp.float32, -bound1, bound1)
    bound2 = 1.0 / math.sqrt(d_ff)
    w2 = jax.random.uniform(k2, (d_ff, d_model), jnp.float32, -bound2, bound2)
    b2 = jax.random.uniform(kb2, (d_model,), jnp.float32, -bound2, bound2)
    gamma = jnp.ones((d_model,), jnp.float32)
    beta = jnp.zeros((d_model,), jnp.float32)

    out = poswise_ffn(x, w1, b1, w2, b2, gamma, beta)
    out = jax.block_until_ready(out)

    ref = _reference(x, w1, b1, w2, b2, gamma, beta)
    assert out.shape == (batch, seq, d_model)
    # bf16-fed MXU vs f32 reference: allow ~1e-2 relative error.
    assert jnp.allclose(out, ref, atol=2e-2, rtol=2e-2), "mismatch vs reference"

    print("KERNEL_OK")
</pallas_src>

<mosaic_0001>
module attributes {stable_mosaic.version = 11 : i64} {
  func.func @_ffn_kernel(%arg0: i32, %arg1: i32, %arg2: memref<8x128xf32, #tpu.memory_space<vmem>>, %arg3: memref<128x128xbf16, #tpu.memory_space<vmem>>, %arg4: memref<1x128xf32, #tpu.memory_space<vmem>>, %arg5: memref<128x128xbf16, #tpu.memory_space<vmem>>, %arg6: memref<1x128xf32, #tpu.memory_space<vmem>>, %arg7: memref<1x128xf32, #tpu.memory_space<vmem>>, %arg8: memref<1x128xf32, #tpu.memory_space<vmem>>, %arg9: memref<8x128xf32, #tpu.memory_space<vmem>>, %arg10: memref<8x128xf32, #tpu.memory_space<vmem>>) attributes {dimension_semantics = [#tpu.dimension_semantics<parallel>, #tpu.dimension_semantics<arbitrary>], iteration_bounds = array<i64: 2, 1>, scalar_prefetch = 0 : i64, scratch_operands = 1 : i64, tpu.core_type = #tpu.core_type<tc>, window_params = [{transform_indices = @transform_0, window_bounds = array<i64: 8, 128>}, {transform_indices = @transform_1, window_bounds = array<i64: 128, 128>}, {transform_indices = @transform_2, window_bounds = array<i64: 1, 128>}, {transform_indices = @transform_3, window_bounds = array<i64: 128, 128>}, {pipeline_mode = #tpu.pipeline_mode<synchronous>, transform_indices = @transform_4, window_bounds = array<i64: 1, 128>}, {pipeline_mode = #tpu.pipeline_mode<synchronous>, transform_indices = @transform_5, window_bounds = array<i64: 1, 128>}, {pipeline_mode = #tpu.pipeline_mode<synchronous>, transform_indices = @transform_6, window_bounds = array<i64: 1, 128>}, {transform_indices = @transform_7, window_bounds = array<i64: 8, 128>}]} {
    %c0_i32 = arith.constant 0 : i32
    %0 = arith.cmpi eq, %arg1, %c0_i32 : i32
    %1 = arith.extui %0 : i1 to i32
    %c0_i32_0 = arith.constant 0 : i32
    %2 = arith.cmpi ne, %1, %c0_i32_0 : i32
    scf.if %2 {
      %cst_19 = arith.constant 0.000000e+00 : f32
      %32 = vector.broadcast %cst_19 : f32 to vector<8x128xf32>
      %c0_20 = arith.constant 0 : index
      %c0_21 = arith.constant 0 : index
      %33 = vector.load %arg10[%c0_20, %c0_21] : memref<8x128xf32, #tpu.memory_space<vmem>>, vector<8x128xf32>
      tpu.vector_store %arg10[%c0_20, %c0_21], %32 {strides = array<i32>} : memref<8x128xf32, #tpu.memory_space<vmem>>, vector<8x128xf32>,
    } else {
    }
    %c0 = arith.constant 0 : index
    %c0_1 = arith.constant 0 : index
    %3 = vector.load %arg2[%c0, %c0_1] : memref<8x128xf32, #tpu.memory_space<vmem>>, vector<8x128xf32>
    %4 = arith.truncf %3 : vector<8x128xf32> to vector<8x128xbf16>
    %c0_2 = arith.constant 0 : index
    %c0_3 = arith.constant 0 : index
    %5 = vector.load %arg3[%c0_2, %c0_3] : memref<128x128xbf16, #tpu.memory_space<vmem>>, vector<128x128xbf16>
    %cst = arith.constant dense<0.000000e+00> : vector<8x128xf32>
    %6 = tpu.matmul %4, %5, %cst {dimension_numbers = #tpu.dot_dimension_numbers<[1], [0], [0], [1], [0, 0, 1, 1], [], []>} : vector<8x128xbf16>, vector<128x128xbf16>, vector<8x128xf32> -> vector<8x128xf32>
    %c0_4 = arith.constant 0 : index
    %c0_5 = arith.constant 0 : index
    %7 = vector.load %arg4[%c0_4, %c0_5] : memref<1x128xf32, #tpu.memory_space<vmem>>, vector<1x128xf32>
    %8 = vector.broadcast %7 : vector<1x128xf32> to vector<8x128xf32>
    %9 = arith.addf %6, %8 : vector<8x128xf32>
    %cst_6 = arith.constant 5.000000e-01 : f32
    %10 = vector.broadcast %cst_6 : f32 to vector<8x128xf32>
    %11 = arith.mulf %10, %9 : vector<8x128xf32>
    %cst_7 = arith.constant 4.471500e-02 : f32
    %12 = vector.broadcast %cst_7 : f32 to vector<8x128xf32>
    %13 = arith.mulf %12, %9 : vector<8x128xf32>
    %14 = arith.mulf %13, %9 : vector<8x128xf32>
    %15 = arith.mulf %14, %9 : vector<8x128xf32>
    %16 = arith.addf %9, %15 : vector<8x128xf32>
    %cst_8 = arith.constant 0.797884583 : f32
    %17 = vector.broadcast %cst_8 : f32 to vector<8x128xf32>
    %18 = arith.mulf %17, %16 : vector<8x128xf32>
    %19 = math.tanh %18 : vector<8x128xf32>
    %cst_9 = arith.constant 1.000000e+00 : f32
    %20 = vector.broadcast %cst_9 : f32 to vector<8x128xf32>
    %21 = arith.addf %20, %19 : vector<8x128xf32>
    %22 = arith.mulf %11, %21 : vector<8x128xf32>
    %c0_10 = arith.constant 0 : index
    %c0_11 = arith.constant 0 : index
    %23 = vector.load %arg10[%c0_10, %c0_11] : memref<8x128xf32, #tpu.memory_space<vmem>>, vector<8x128xf32>
    %24 = arith.truncf %22 : vector<8x128xf32> to vector<8x128xbf16>
    %c0_12 = arith.constant 0 : index
    %c0_13 = arith.constant 0 : index
    %25 = vector.load %arg5[%c0_12, %c0_13] : memref<128x128xbf16, #tpu.memory_space<vmem>>, vector<128x128xbf16>
    %cst_14 = arith.constant dense<0.000000e+00> : vector<8x128xf32>
    %26 = tpu.matmul %24, %25, %cst_14 {dimension_numbers = #tpu.dot_dimension_numbers<[1], [0], [0], [1], [0, 0, 1, 1], [], []>} : vector<8x128xbf16>, vector<128x128xbf16>, vector<8x128xf32> -> vector<8x128xf32>
    %27 = arith.addf %23, %26 : vector<8x128xf32>
    %c0_15 = arith.constant 0 : index
    %c0_16 = arith.constant 0 : index
    %28 = vector.load %arg10[%c0_15, %c0_16] : memref<8x128xf32, #tpu.memory_space<vmem>>, vector<8x128xf32>
    tpu.vector_store %arg10[%c0_15, %c0_16], %27 {strides = array<i32>} : memref<8x128xf32, #tpu.memory_space<vmem>>, vector<8x128xf32>,
    %c0_i32_17 = arith.constant 0 : i32
    %29 = arith.cmpi eq, %arg1, %c0_i32_17 : i32
    %30 = arith.extui %29 : i1 to i32
    %c0_i32_18 = arith.constant 0 : i32
    %31 = arith.cmpi ne, %30, %c0_i32_18 : i32
    scf.if %31 {
      %c0_19 = arith.constant 0 : index
      %c0_20 = arith.constant 0 : index
      %32 = vector.load %arg10[%c0_19, %c0_20] : memref<8x128xf32, #tpu.memory_space<vmem>>, vector<8x128xf32>
      %c0_21 = arith.constant 0 : index
      %c0_22 = arith.constant 0 : index
      %33 = vector.load %arg6[%c0_21, %c0_22] : memref<1x128xf32, #tpu.memory_space<vmem>>, vector<1x128xf32>
      %34 = vector.broadcast %33 : vector<1x128xf32> to vector<8x128xf32>
      %35 = arith.addf %32, %34 : vector<8x128xf32>
      %c0_23 = arith.constant 0 : index
      %c0_24 = arith.constant 0 : index
      %36 = vector.load %arg2[%c0_23, %c0_24] : memref<8x128xf32, #tpu.memory_space<vmem>>, vector<8x128xf32>
      %37 = arith.addf %35, %36 : vector<8x128xf32>
      %38 = tpu.iota {dimensions = array<i32: 1>} : vector<1x128xi32>
      %c32_i32 = arith.constant 32 : i32
      %39 = vector.broadcast %c32_i32 : i32 to vector<1x128xi32>
      %40 = arith.cmpi slt, %38, %39 : vector<1x128xi32>
      %41 = arith.extui %40 : vector<1x128xi1> to vector<1x128xi32>
      %42 = arith.sitofp %41 : vector<1x128xi32> to vector<1x128xf32>
      %43 = vector.broadcast %42 : vector<1x128xf32> to vector<8x128xf32>
      %44 = arith.mulf %37, %43 : vector<8x128xf32>
      %cst_25 = arith.constant dense<0.000000e+00> : vector<8xf32>
      %45 = vector.multi_reduction <add>, %44, %cst_25 [1] : vector<8x128xf32> to vector<8xf32>
      %46 = vector.shape_cast %45 : vector<8xf32> to vector<8x1xf32>
      %cst_26 = arith.constant 3.125000e-02 : f32
      %47 = vector.broadcast %cst_26 : f32 to vector<8x1xf32>
      %48 = arith.mulf %46, %47 : vector<8x1xf32>
      %49 = vector.broadcast %48 : vector<8x1xf32> to vector<8x128xf32>
      %50 = arith.subf %44, %49 : vector<8x128xf32>
      %51 = vector.broadcast %42 : vector<1x128xf32> to vector<8x128xf32>
      %52 = arith.mulf %50, %51 : vector<8x128xf32>
      %53 = arith.mulf %52, %52 : vector<8x128xf32>
      %cst_27 = arith.constant dense<0.000000e+00> : vector<8xf32>
      %54 = vector.multi_reduction <add>, %53, %cst_27 [1] : vector<8x128xf32> to vector<8xf32>
      %55 = vector.shape_cast %54 : vector<8xf32> to vector<8x1xf32>
      %cst_28 = arith.constant 3.125000e-02 : f32
      %56 = vector.broadcast %cst_28 : f32 to vector<8x1xf32>
      %57 = arith.mulf %55, %56 : vector<8x1xf32>
      %cst_29 = arith.constant 9.99999974E-6 : f32
      %58 = vector.broadcast %cst_29 : f32 to vector<8x1xf32>
      %59 = arith.addf %57, %58 : vector<8x1xf32>
      %60 = math.rsqrt %59 : vector<8x1xf32>
      %61 = vector.broadcast %60 : vector<8x1xf32> to vector<8x128xf32>
      %62 = arith.mulf %52, %61 : vector<8x128xf32>
      %c0_30 = arith.constant 0 : index
      %c0_31 = arith.constant 0 : index
      %63 = vector.load %arg7[%c0_30, %c0_31] : memref<1x128xf32, #tpu.memory_space<vmem>>, vector<1x128xf32>
      %64 = vector.broadcast %63 : vector<1x128xf32> to vector<8x128xf32>
      %65 = arith.mulf %62, %64 : vector<8x128xf32>
      %c0_32 = arith.constant 0 : index
      %c0_33 = arith.constant 0 : index
      %66 = vector.load %arg8[%c0_32, %c0_33] : memref<1x128xf32, #tpu.memory_space<vmem>>, vector<1x128xf32>
      %67 = vector.broadcast %66 : vector<1x128xf32> to vector<8x128xf32>
      %68 = arith.addf %65, %67 : vector<8x128xf32>
      %c0_34 = arith.constant 0 : index
      %c0_35 = arith.constant 0 : index
      %69 = vector.load %arg9[%c0_34, %c0_35] : memref<8x128xf32, #tpu.memory_space<vmem>>, vector<8x128xf32>
      tpu.vector_store %arg9[%c0_34, %c0_35], %68 {strides = array<i32>} : memref<8x128xf32, #tpu.memory_space<vmem>>, vector<8x128xf32>,
    } else {
    }
    return
  }
  func.func @transform_0(%arg0: i32, %arg1: i32) -> (i32, i32) {
    %c0_i32 = arith.constant 0 : i32
    %c0_i32_0 = arith.constant 0 : i32
    return %arg0, %c0_i32 : i32, i32
  }
  func.func @transform_1(%arg0: i32, %arg1: i32) -> (i32, i32) {
    %c0_i32 = arith.constant 0 : i32
    %c0_i32_0 = arith.constant 0 : i32
    return %c0_i32, %arg1 : i32, i32
  }
  func.func @transform_2(%arg0: i32, %arg1: i32) -> (i32, i32) {
    %c0_i32 = arith.constant 0 : i32
    %c0_i32_0 = arith.constant 0 : i32
    return %c0_i32, %arg1 : i32, i32
  }
  func.func @transform_3(%arg0: i32, %arg1: i32) -> (i32, i32) {
    %c0_i32 = arith.constant 0 : i32
    %c0_i32_0 = arith.constant 0 : i32
    return %arg1, %c0_i32 : i32, i32
  }
  func.func @transform_4(%arg0: i32, %arg1: i32) -> (i32, i32) {
    %c0_i32 = arith.constant 0 : i32
    %c0_i32_0 = arith.constant 0 : i32
    %c0_i32_1 = arith.constant 0 : i32
    return %c0_i32, %c0_i32_0 : i32, i32
  }
  func.func @transform_5(%arg0: i32, %arg1: i32) -> (i32, i32) {
    %c0_i32 = arith.constant 0 : i32
    %c0_i32_0 = arith.constant 0 : i32
    %c0_i32_1 = arith.constant 0 : i32
    return %c0_i32, %c0_i32_0 : i32, i32
  }
  func.func @transform_6(%arg0: i32, %arg1: i32) -> (i32, i32) {
    %c0_i32 = arith.constant 0 : i32
    %c0_i32_0 = arith.constant 0 : i32
    %c0_i32_1 = arith.constant 0 : i32
    return %c0_i32, %c0_i32_0 : i32, i32
  }
  func.func @transform_7(%arg0: i32, %arg1: i32) -> (i32, i32) {
    %c0_i32 = arith.constant 0 : i32
    %c0_i32_0 = arith.constant 0 : i32
    return %arg0, %c0_i32 : i32, i32
  }
}

</mosaic_0001>

<llo_original>
// kernel: poswise_ffn.1
$region0: #{poswise_ffn.1}
  #allocation0 [shape = 'u32[]', space=smem, size = 0x4, offset = 0x4, fixed_abs, tag = 'smem constant byte address 0x4 - core index']
  #allocation1 [shape = 'u32[144,128]{1,0:T(1,128)}', space=vmem, size = 0x12000, scoped, tag = 'internal scratch']
  #allocation2 [shape = 'f32[8,128]{1,0:T(8,128)}', space=vmem, size = 0x1000, scoped, tag = 'scratch operand']
  %s0 = inlined_call_operand.vmem [shape: f32[16,128], index: 0, kind: input, shape index: {}]
  %s1 = inlined_call_operand.vmem [shape: bf16[128,128], index: 1, kind: input, shape index: {}]
  %s2 = inlined_call_operand.vmem [shape: f32[1,128], index: 2, kind: input, shape index: {}]
  %s3 = inlined_call_operand.vmem [shape: bf16[128,128], index: 3, kind: input, shape index: {}]
  %s4 = inlined_call_operand.vmem [shape: f32[1,128], index: 4, kind: input, shape index: {}]
  %s5 = inlined_call_operand.vmem [shape: f32[1,128], index: 5, kind: input, shape index: {}]
  %s6 = inlined_call_operand.vmem [shape: f32[1,128], index: 6, kind: input, shape index: {}]
  %s7 = inlined_call_operand.vmem [shape: f32[16,128], index: 7, kind: output, shape index: {}]
  %s8 = sld [smem:[#allocation0]]
  $region69: #{poswise_ffn.1} parent=0
    _
  %s10 = ssub.s32 1, %s8
  %s11 = scalar_select 0, %s10, %s8
  loop: start=0, step=1, limit=4
  $region2: #{poswise_ffn.1} parent=0 // loop_pre_header
    _
  $region3: #{poswise_ffn.1} parent=0 // loop_header
    %s13 = sphi 0, %s17
    %p14 = scmp.ge.s32.totalorder %s13, 4
    %s20 = sphi 0, %s32
    %s21 = sphi 0, %s28
    %s22 = sphi 0, %s20
    %s23 = sphi 0, %s21
    %s24 = sphi 0, %s22
    %s25 = sphi 0, %s23
    %s35 = sphi 0, %s37
    %s38 = sphi 0, %s35
    %s39 = sphi 0, %s38
    %s55 = sphi 0, %s39
    %s61 = sphi 0, %s63
    %s64 = sphi 0, %s61
    %s65 = sphi 0, %s64
    %s81 = sphi 0, %s65
    %s87 = sphi 0, %s89
    %s90 = sphi 0, %s87
    %s91 = sphi 0, %s90
    %s107 = sphi 0, %s91
    %s113 = sphi 0, %s115
    %s116 = sphi 0, %s113
    %s117 = sphi 0, %s116
    %s133 = sphi 0, %s117
    %s137 = sphi 0, %s137
    %s139 = sphi 0, %s137
    %s140 = sphi 0, %s139
    %s154 = sphi 0, %s140
    %s158 = sphi 0, %s158
    %s160 = sphi 0, %s158
    %s161 = sphi 0, %s160
    %s175 = sphi 0, %s161
    %s179 = sphi 0, %s179
    %s181 = sphi 0, %s179
    %s182 = sphi 0, %s181
    %s196 = sphi 0, %s182
    %s202 = sphi 0, %s204
    %s205 = sphi 0, %s202
    %s206 = sphi 0, %s205
    %s222 = sphi 0, %s206
  $region4: #{poswise_ffn.1} parent=0 // loop_header_branch
    %16 = sbr.rel (%p14) target = $region8
  $region5: #{poswise_ffn.1} parent=0 // loop_body
    %s18 = ssub.s32 %s13, 1
    %s19 = ssub.s32 %s13, 2
    %s26 = sadd.s32 1, %s21
    %p27 = scmp.ge.s32.totalorder %s26, 1
    %s28 = scalar_select %p27, 0, %s26
    %s29 = sadd.s32 1, %s20
    %s30 = scalar_select %p27, %s29, %s20
    %p31 = scmp.ge.s32.totalorder %s30, 2
    %s32 = scalar_select %p31, 0, %s30
    %s33 = ssub.s32 %s20, %s32
    %p34 = scmp.eq.s32.totalorder %s33, 0
    %s36 = sadd.s32 %s35, 1
    %s37 = scalar_select %p34, %s35, %s36
    %p40 = pneg %p34
    %p41 = scmp.eq.s32.totalorder %s13, 1
    %p42 = por %p40, %p41
    %p43 = scmp.ne.s32.totalorder %s35, %s38
    %p44 = scmp.eq.s32.totalorder %s13, 0
    %p45 = por %p43, %p44
    %p46 = scmp.ne.s32.totalorder %s35, %s38
    %p47 = scmp.eq.s32.totalorder %s18, 1
    %p48 = por %p46, %p47
    %p49 = scmp.ne.s32.totalorder %s38, %s39
    %p50 = scmp.eq.s32.totalorder %s18, 0
    %p51 = por %p49, %p50
    %p52 = scmp.ne.s32.totalorder %s38, %s39
    %p53 = scmp.eq.s32.totalorder %s19, 1
    %p54 = por %p52, %p53
    %p56 = scmp.ne.s32.totalorder %s39, %s55
    %p57 = scmp.eq.s32.totalorder %s19, 0
    %p58 = por %p56, %p57
    %s59 = ssub.s32 %s21, %s28
    %p60 = scmp.eq.s32.totalorder %s59, 0
    %s62 = sadd.s32 %s61, 1
    %s63 = scalar_select %p60, %s61, %s62
    %p66 = pneg %p60
    %p67 = scmp.eq.s32.totalorder %s13, 1
    %p68 = por %p66, %p67
    %p69 = scmp.ne.s32.totalorder %s61, %s64
    %p70 = scmp.eq.s32.totalorder %s13, 0
    %p71 = por %p69, %p70
    %p72 = scmp.ne.s32.totalorder %s61, %s64
    %p73 = scmp.eq.s32.totalorder %s18, 1
    %p74 = por %p72, %p73
    %p75 = scmp.ne.s32.totalorder %s64, %s65
    %p76 = scmp.eq.s32.totalorder %s18, 0
    %p77 = por %p75, %p76
    %p78 = scmp.ne.s32.totalorder %s64, %s65
    %p79 = scmp.eq.s32.totalorder %s19, 1
    %p80 = por %p78, %p79
    %p82 = scmp.ne.s32.totalorder %s65, %s81
    %p83 = scmp.eq.s32.totalorder %s19, 0
    %p84 = por %p82, %p83
    %s85 = ssub.s32 %s21, %s28
    %p86 = scmp.eq.s32.totalorder %s85, 0
    %s88 = sadd.s32 %s87, 1
    %s89 = scalar_select %p86, %s87, %s88
    %p92 = pneg %p86
    %p93 = scmp.eq.s32.totalorder %s13, 1
    %p94 = por %p92, %p93
    %p95 = scmp.ne.s32.totalorder %s87, %s90
    %p96 = scmp.eq.s32.totalorder %s13, 0
    %p97 = por %p95, %p96
    %p98 = scmp.ne.s32.totalorder %s87, %s90
    %p99 = scmp.eq.s32.totalorder %s18, 1
    %p100 = por %p98, %p99
    %p101 = scmp.ne.s32.totalorder %s90, %s91
    %p102 = scmp.eq.s32.totalorder %s18, 0
    %p103 = por %p101, %p102
    %p104 = scmp.ne.s32.totalorder %s90, %s91
    %p105 = scmp.eq.s32.totalorder %s19, 1
    %p106 = por %p104, %p105
    %p108 = scmp.ne.s32.totalorder %s91, %s107
    %p109 = scmp.eq.s32.totalorder %s19, 0
    %p110 = por %p108, %p109
    %s111 = ssub.s32 %s21, %s28
    %p112 = scmp.eq.s32.totalorder %s111, 0
    %s114 = sadd.s32 %s113, 1
    %s115 = scalar_select %p112, %s113, %s114
    %p118 = pneg %p112
    %p119 = scmp.eq.s32.totalorder %s13, 1
    %p120 = por %p118, %p119
    %p121 = scmp.ne.s32.totalorder %s113, %s116
    %p122 = scmp.eq.s32.totalorder %s13, 0
    %p123 = por %p121, %p122
    %p124 = scmp.ne.s32.totalorder %s113, %s116
    %p125 = scmp.eq.s32.totalorder %s18, 1
    %p126 = por %p124, %p125
    %p127 = scmp.ne.s32.totalorder %s116, %s117
    %p128 = scmp.eq.s32.totalorder %s18, 0
    %p129 = por %p127, %p128
    %p130 = scmp.ne.s32.totalorder %s116, %s117
    %p131 = scmp.eq.s32.totalorder %s19, 1
    %p132 = por %p130, %p131
    %p134 = scmp.ne.s32.totalorder %s117, %s133
    %p135 = scmp.eq.s32.totalorder %s19, 0
    %p136 = por %p134, %p135
    %s138 = sadd.s32 %s137, 1
    %p141 = scmp.eq.s32.totalorder %s13, 1
    %p142 = scmp.ne.s32.totalorder %s137, %s139
    %p143 = scmp.eq.s32.totalorder %s13, 0
    %p144 = por %p142, %p143
    %p145 = scmp.ne.s32.totalorder %s137, %s139
    %p146 = scmp.eq.s32.totalorder %s18, 1
    %p147 = por %p145, %p146
    %p148 = scmp.ne.s32.totalorder %s139, %s140
    %p149 = scmp.eq.s32.totalorder %s18, 0
    %p150 = por %p148, %p149
    %p151 = scmp.ne.s32.totalorder %s139, %s140
    %p152 = scmp.eq.s32.totalorder %s19, 1
    %p153 = por %p151, %p152
    %p155 = scmp.ne.s32.totalorder %s140, %s154
    %p156 = scmp.eq.s32.totalorder %s19, 0
    %p157 = por %p155, %p156
    %s159 = sadd.s32 %s158, 1
    %p162 = scmp.eq.s32.totalorder %s13, 1
    %p163 = scmp.ne.s32.totalorder %s158, %s160
    %p164 = scmp.eq.s32.totalorder %s13, 0
    %p165 = por %p163, %p164
    %p166 = scmp.ne.s32.totalorder %s158, %s160
    %p167 = scmp.eq.s32.totalorder %s18, 1
    %p168 = por %p166, %p167
    %p169 = scmp.ne.s32.totalorder %s160, %s161
    %p170 = scmp.eq.s32.totalorder %s18, 0
    %p171 = por %p169, %p170
    %p172 = scmp.ne.s32.totalorder %s160, %s161
    %p173 = scmp.eq.s32.totalorder %s19, 1
    %p174 = por %p172, %p173
    %p176 = scmp.ne.s32.totalorder %s161, %s175
    %p177 = scmp.eq.s32.totalorder %s19, 0
    %p178 = por %p176, %p177
    %s180 = sadd.s32 %s179, 1
    %p183 = scmp.eq.s32.totalorder %s13, 1
    %p184 = scmp.ne.s32.totalorder %s179, %s181
    %p185 = scmp.eq.s32.totalorder %s13, 0
    %p186 = por %p184, %p185
    %p187 = scmp.ne.s32.totalorder %s179, %s181
    %p188 = scmp.eq.s32.totalorder %s18, 1
    %p189 = por %p187, %p188
    %p190 = scmp.ne.s32.totalorder %s181, %s182
    %p191 = scmp.eq.s32.totalorder %s18, 0
    %p192 = por %p190, %p191
    %p193 = scmp.ne.s32.totalorder %s181, %s182
    %p194 = scmp.eq.s32.totalorder %s19, 1
    %p195 = por %p193, %p194
    %p197 = scmp.ne.s32.totalorder %s182, %s196
    %p198 = scmp.eq.s32.totalorder %s19, 0
    %p199 = por %p197, %p198
    %s200 = ssub.s32 %s20, %s32
    %p201 = scmp.eq.s32.totalorder %s200, 0
    %s203 = sadd.s32 %s202, 1
    %s204 = scalar_select %p201, %s202, %s203
    %p207 = pneg %p201
    %p208 = scmp.eq.s32.totalorder %s13, 1
    %p209 = por %p207, %p208
    %p210 = scmp.ne.s32.totalorder %s202, %s205
    %p211 = scmp.eq.s32.totalorder %s13, 0
    %p212 = por %p210, %p211
    %p213 = scmp.ne.s32.totalorder %s202, %s205
    %p214 = scmp.eq.s32.totalorder %s18, 1
    %p215 = por %p213, %p214
    %p216 = scmp.ne.s32.totalorder %s205, %s206
    %p217 = scmp.eq.s32.totalorder %s18, 0
    %p218 = por %p216, %p217
    %p219 = scmp.ne.s32.totalorder %s205, %s206
    %p220 = scmp.eq.s32.totalorder %s19, 1
    %p221 = por %p219, %p220
    %p223 = scmp.ne.s32.totalorder %s206, %s222
    %p224 = scmp.eq.s32.totalorder %s19, 0
    %p225 = por %p223, %p224
    %p226 = scmp.le.s32.totalorder 1, %s13
    %p227 = scmp.lt.s32.totalorder %s13, 3
    %p228 = pnand %p226, %p227
    %p229 = pneg %p228
    // Predicated region
    $region9: #{poswise_ffn.1} parent=5 // pred_check
      _
    $region10: #{poswise_ffn.1} parent=5 // pred_check_branch
      %231 = sbr.rel (%p228) target = $region12
    $region11: #{poswise_ffn.1} parent=5 // pred_region
      %s232 = ssub.s32 %s13, 1
      // Predicated region
      $region13: #{poswise_ffn.1} parent=11 // pred_check
        %p233 = pneg %p77
      $region14: #{poswise_ffn.1} parent=11 // pred_check_branch
        %235 = sbr.rel (%p233) target = $region16
      $region15: #{poswise_ffn.1} parent=11 // pred_region
        %p236 = scmp.lt.s32.totalorder %s23, 0
        %s237 = scalar_select %p236, %s23, 0
        %s238 = smul.addr %s237, 4
        %s239 = scalar_lea.vmem %s1, %s238
      $region16: #{poswise_ffn.1} parent=11 // pred_fallthru
        _
      // Predicated region
      $region17: #{poswise_ffn.1} parent=11 // pred_check
        %p240 = pneg %p103
      $region18: #{poswise_ffn.1} parent=11 // pred_check_branch
        %242 = sbr.rel (%p240) target = $region20
      $region19: #{poswise_ffn.1} parent=11 // pred_region
        %p243 = scmp.lt.s32.totalorder %s23, 0
        %s244 = scalar_select %p243, %s23, 0
        %s245 = scalar_lea.vmem %s2, %s244
      $region20: #{poswise_ffn.1} parent=11 // pred_fallthru
        _
      // Predicated region
      $region21: #{poswise_ffn.1} parent=11 // pred_check
        %p246 = pneg %p129
      $region22: #{poswise_ffn.1} parent=11 // pred_check_branch
        %248 = sbr.rel (%p246) target = $region24
      $region23: #{poswise_ffn.1} parent=11 // pred_region
        %s249 = smul.u32 16, %s23
        %p250 = scmp.lt.s32.totalorder %s249, 15
        %s251 = scalar_select %p250, %s249, 15
        %s252 = smul.addr %s251, 4
        %s253 = scalar_lea.vmem %s3, %s252
        %s254 = smul.u32 16, %s23
      $region24: #{poswise_ffn.1} parent=11 // pred_fallthru
        _
      // Predicated region
      $region25: #{poswise_ffn.1} parent=11 // pred_check
        %p255 = pneg %p150
      $region26: #{poswise_ffn.1} parent=11 // pred_check_branch
        %257 = sbr.rel (%p255) target = $region28
      $region27: #{poswise_ffn.1} parent=11 // pred_region
        _
      $region28: #{poswise_ffn.1} parent=11 // pred_fallthru
        _
      // Predicated region
      $region29: #{poswise_ffn.1} parent=11 // pred_check
        %p258 = pneg %p171
      $region30: #{poswise_ffn.1} parent=11 // pred_check_branch
        %260 = sbr.rel (%p258) target = $region32
      $region31: #{poswise_ffn.1} parent=11 // pred_region
        _
      $region32: #{poswise_ffn.1} parent=11 // pred_fallthru
        _
      // Predicated region
      $region33: #{poswise_ffn.1} parent=11 // pred_check
        %p261 = pneg %p192
      $region34: #{poswise_ffn.1} parent=11 // pred_check_branch
        %263 = sbr.rel (%p261) target = $region36
      $region35: #{poswise_ffn.1} parent=11 // pred_region
        _
      $region36: #{poswise_ffn.1} parent=11 // pred_fallthru
        _
    $region12: #{poswise_ffn.1} parent=5 // pred_fallthru
      _
    %p264 = scmp.lt.s32.totalorder %s13, 2
    // Predicated region
    $region37: #{poswise_ffn.1} parent=5 // pred_check
      %p265 = pneg %p264
    $region38: #{poswise_ffn.1} parent=5 // pred_check_branch
      %267 = sbr.rel (%p265) target = $region40
    $region39: #{poswise_ffn.1} parent=5 // pred_region
      // Predicated region
      $region41: #{poswise_ffn.1} parent=39 // pred_check
        %p268 = pneg %p45
      $region42: #{poswise_ffn.1} parent=39 // pred_check_branch
        %270 = sbr.rel (%p268) target = $region44
      $region43: #{poswise_ffn.1} parent=39 // pred_region
        %p271 = scmp.lt.s32.totalorder %s20, 1
        %s272 = scalar_select %p271, %s20, 1
        %s273 = smul.addr %s272, 8
        %s274 = scalar_lea.vmem %s0, %s273
      $region44: #{poswise_ffn.1} parent=39 // pred_fallthru
        _
    $region40: #{poswise_ffn.1} parent=5 // pred_fallthru
      _
    %p275 = scmp.le.s32.totalorder 1, %s13
    %p276 = scmp.lt.s32.totalorder %s13, 3
    %p277 = pnand %p275, %p276
    %p278 = pneg %p277
    // Predicated region
    $region45: #{poswise_ffn.1} parent=5 // pred_check
      _
    $region46: #{poswise_ffn.1} parent=5 // pred_check_branch
      %280 = sbr.rel (%p277) target = $region48
    $region47: #{poswise_ffn.1} parent=5 // pred_region
      %s281 = ssub.s32 %s13, 1
      %p282 = scmp.lt.s32.totalorder %s22, 1
      %s283 = scalar_select %p282, %s22, 1
      %s284 = smul.addr %s283, 8
      %s285 = scalar_lea.vmem %s0, %s284
      %p286 = pneg %p51
      %p287 = pneg %p48
      %p288 = scmp.lt.s32.totalorder %s23, 0
      %s289 = scalar_select %p288, %s23, 0
      %s290 = smul.addr %s289, 4
      %s291 = scalar_lea.vmem %s1, %s290
      %p292 = pneg %p77
      %p293 = pneg %p74
      %p294 = scmp.lt.s32.totalorder %s23, 0
      %s295 = scalar_select %p294, %s23, 0
      %s296 = scalar_lea.vmem %s2, %s295
      %p297 = pneg %p103
      %p298 = pneg %p100
      %s299 = smul.u32 16, %s23
      %p300 = scmp.lt.s32.totalorder %s299, 15
      %s301 = scalar_select %p300, %s299, 15
      %s302 = smul.addr %s301, 4
      %s303 = scalar_lea.vmem %s3, %s302
      %p304 = pneg %p129
      %p305 = pneg %p126
      %p306 = pneg %p150
      %p307 = pneg %p147
      %p308 = pneg %p171
      %p309 = pneg %p168
      %p310 = pneg %p192
      %p311 = pneg %p189
      %p312 = pneg %p218
      %p313 = pneg %p215
      %p314 = scmp.lt.s32.totalorder %s22, 1
      %s315 = scalar_select %p314, %s22, 1
      %s316 = smul.addr %s315, 8
      %s317 = scalar_lea.vmem %s7, %s316
      %p318 = scmp.lt.s32.totalorder %s22, 1
      %s319 = scalar_select %p318, %s22, 1
      %s320 = smul.addr %s319, 8
      %s321 = scalar_lea.vmem %s0, %s320
      %p322 = scmp.lt.s32.totalorder %s23, 0
      %s323 = scalar_select %p322, %s23, 0
      %s324 = smul.addr %s323, 4
      %s325 = scalar_lea.vmem %s1, %s324
      %p326 = scmp.lt.s32.totalorder %s23, 0
      %s327 = scalar_select %p326, %s23, 0
      %s328 = scalar_lea.vmem %s2, %s327
      %s329 = smul.u32 16, %s23
      %p330 = scmp.lt.s32.totalorder %s329, 15
      %s331 = scalar_select %p330, %s329, 15
      %s332 = smul.addr %s331, 4
      %s333 = scalar_lea.vmem %s3, %s332
      %s334 = smul.u32 16, %s23
      %p335 = scmp.lt.s32.totalorder %s22, 1
      %s336 = scalar_select %p335, %s22, 1
      %s337 = smul.addr %s336, 8
      %s338 = scalar_lea.vmem %s7, %s337
      %p340 = scmp.eq.s32.totalorder %s23, 0
      // Predicated region
      $region49: #{poswise_ffn.1} parent=47 // pred_check
        %p341 = pneg %p340
      $region50: #{poswise_ffn.1} parent=47 // pred_check_branch
        %343 = sbr.rel (%p341) target = $region52
      $region51: #{poswise_ffn.1} parent=47 // pred_region
        %344 = vst [vmem:[#allocation2] sm:$0xff] 0.0
      $region52: #{poswise_ffn.1} parent=47 // pred_fallthru
        _
      %v345 = vld [vmem:[%s321] sm:$0xff]
      %v346 = vpack.c.bf16 %v345, %v345
      %v347 = vld [vmem:[%s325] sm:$0xf]
      %v348 = vld [vmem:[%s325 + $0x4] sm:$0xf]
      %v349 = vld [vmem:[%s325 + $0x8] sm:$0xf]
      %v350 = vld [vmem:[%s325 + $0xc] sm:$0xf]
      %v351 = vld [vmem:[%s325 + $0x10] sm:$0xf]
      %v352 = vld [vmem:[%s325 + $0x14] sm:$0xf]
      %v353 = vld [vmem:[%s325 + $0x18] sm:$0xf]
      %v354 = vld [vmem:[%s325 + $0x1c] sm:$0xf]
      %v355 = vld [vmem:[%s325 + $0x20] sm:$0xf]
      %v356 = vld [vmem:[%s325 + $0x24] sm:$0xf]
      %v357 = vld [vmem:[%s325 + $0x28] sm:$0xf]
      %v358 = vld [vmem:[%s325 + $0x2c] sm:$0xf]
      %v359 = vld [vmem:[%s325 + $0x30] sm:$0xf]
      %v360 = vld [vmem:[%s325 + $0x34] sm:$0xf]
      %v361 = vld [vmem:[%s325 + $0x38] sm:$0xf]
      %v362 = vld [vmem:[%s325 + $0x3c] sm:$0xf]
      %v363 = vld [vmem:[%s328] sm:$0x1]
      %v365 = vlaneseq
      %v366 = vshrl.u32 %v365, 7
      %v367 = vsub.s32 0, %v366
      %v368 = vrot.slane %v363, %v367
      %v386 = vunpack.c.l.b16 %v347
      %v387 = vunpack.c.l.b16 %v348
      %v388 = vunpack.c.l.b16 %v349
      %v389 = vunpack.c.l.b16 %v350
      %v390 = vunpack.c.l.b16 %v351
      %v391 = vunpack.c.l.b16 %v352
      %v392 = vunpack.c.l.b16 %v353
      %v393 = vunpack.c.l.b16 %v354
      %v394 = vunpack.c.l.b16 %v355
      %v395 = vunpack.c.l.b16 %v356
      %v396 = vunpack.c.l.b16 %v357
      %v397 = vunpack.c.l.b16 %v358
      %v398 = vunpack.c.l.b16 %v359
      %v399 = vunpack.c.l.b16 %v360
      %v400 = vunpack.c.l.b16 %v361
      %v401 = vunpack.c.l.b16 %v362
      %v402 = vpack.c.b16 %v387, %v386
      %v403 = vpack.c.b16 %v389, %v388
      %v404 = vpack.c.b16 %v391, %v390
      %v405 = vpack.c.b16 %v393, %v392
      %v406 = vpack.c.b16 %v395, %v394
      %v407 = vpack.c.b16 %v397, %v396
      %v408 = vpack.c.b16 %v399, %v398
      %v409 = vpack.c.b16 %v401, %v400
      %418 = vmatprep.subr.bf16.mxu0 0
      %419 = vmatpush1.bf16.msra.mxu0 %v402
      %420 = vmatprep.subr.bf16.mxu0 0
      %421 = vmatpush1.bf16.msra.mxu0 %v403
      %422 = vmatprep.subr.bf16.mxu0 0
      %423 = vmatpush1.bf16.msra.mxu0 %v404
      %424 = vmatprep.subr.bf16.mxu0 0
      %425 = vmatpush1.bf16.msra.mxu0 %v405
      %426 = vmatprep.subr.bf16.mxu0 0
      %427 = vmatpush1.bf16.msra.mxu0 %v406
      %428 = vmatprep.subr.bf16.mxu0 0
      %429 = vmatpush1.bf16.msra.mxu0 %v407
      %430 = vmatprep.subr.bf16.mxu0 0
      %431 = vmatpush1.bf16.msra.mxu0 %v408
      %432 = vmatprep.subr.bf16.mxu0 0
      %433 = vmatpush1.bf16.msra.mxu0 %v409
      %434 = vmatprep.subr.bf16.mxu0 0
      %435 = vmatpush1.bf16.msra.mxu0 0
      %436 = vmatprep.subr.bf16.mxu0 0
      %437 = vmatpush1.bf16.msra.mxu0 0
      %438 = vmatprep.subr.bf16.mxu0 0
      %439 = vmatpush1.bf16.msra.mxu0 0
      %440 = vmatprep.subr.bf16.mxu0 0
      %441 = vmatpush1.bf16.msra.mxu0 0
      %442 = vmatprep.subr.bf16.mxu0 0
      %443 = vmatpush1.bf16.msra.mxu0 0
      %444 = vmatprep.subr.bf16.mxu0 0
      %445 = vmatpush1.bf16.msra.mxu0 0
      %446 = vmatprep.subr.bf16.mxu0 0
      %447 = vmatpush1.bf16.msra.mxu0 0
      %448 = vmatprep.subr.bf16.mxu0 0
      %449 = vmatpush1.bf16.msra.mxu0 0
      %450 = vmatprep.mubr.bf16.mxu0 0
      %451 = vmatmul.mubr.bf16.gmra.mrb[0].mxu0 %v346
      %v452 = vpop.f32.mrb[0].mxu0
      %v453 = vadd.f32 %v368, %v452
      %v454 = vpop.f32.mrb[0].mxu0
      %v455 = vpop.f32.mrb[0].mxu0
      %v456 = vpop.f32.mrb[0].mxu0
      %457 = vdwg.mxu0
      %v458 = vmul.f32 %v453, 0.5
      %v459 = vmul.f32 %v453, 0.044715
      %v460 = vmul.f32 %v459, %v453
      %v461 = vmul.f32 %v460, %v453
      %v462 = vadd.f32 %v453, %v461
      %v463 = vmul.f32 %v462, 0.7978846
      %v464 = vtanh.pop %v463
      %v465 = vadd.f32 %v464, 1.0
      %v466 = vmul.f32 %v458, %v465
      %v467 = vld [vmem:[#allocation2] sm:$0xff]
      %v468 = vpack.c.bf16 %v466, %v466
      %v469 = vld [vmem:[%s333] sm:$0xf]
      %v470 = vld [vmem:[%s333 + $0x4] sm:$0xf]
      %v471 = vld [vmem:[%s333 + $0x8] sm:$0xf]
      %v472 = vld [vmem:[%s333 + $0xc] sm:$0xf]
      %v473 = vld [vmem:[%s333 + $0x10] sm:$0xf]
      %v474 = vld [vmem:[%s333 + $0x14] sm:$0xf]
      %v475 = vld [vmem:[%s333 + $0x18] sm:$0xf]
      %v476 = vld [vmem:[%s333 + $0x1c] sm:$0xf]
      %v477 = vld [vmem:[%s333 + $0x20] sm:$0xf]
      %v478 = vld [vmem:[%s333 + $0x24] sm:$0xf]
      %v479 = vld [vmem:[%s333 + $0x28] sm:$0xf]
      %v480 = vld [vmem:[%s333 + $0x2c] sm:$0xf]
      %v481 = vld [vmem:[%s333 + $0x30] sm:$0xf]
      %v482 = vld [vmem:[%s333 + $0x34] sm:$0xf]
      %v483 = vld [vmem:[%s333 + $0x38] sm:$0xf]
      %v484 = vld [vmem:[%s333 + $0x3c] sm:$0xf]
      %v501 = vunpack.c.l.b16 %v469
      %v502 = vunpack.c.l.b16 %v470
      %v503 = vunpack.c.l.b16 %v471
      %v504 = vunpack.c.l.b16 %v472
      %v505 = vunpack.c.l.b16 %v473
      %v506 = vunpack.c.l.b16 %v474
      %v507 = vunpack.c.l.b16 %v475
      %v508 = vunpack.c.l.b16 %v476
      %v509 = vunpack.c.l.b16 %v477
      %v510 = vunpack.c.l.b16 %v478
      %v511 = vunpack.c.l.b16 %v479
      %v512 = vunpack.c.l.b16 %v480
      %v513 = vunpack.c.l.b16 %v481
      %v514 = vunpack.c.l.b16 %v482
      %v515 = vunpack.c.l.b16 %v483
      %v516 = vunpack.c.l.b16 %v484
      %v517 = vpack.c.b16 %v502, %v501
      %v518 = vpack.c.b16 %v504, %v503
      %v519 = vpack.c.b16 %v506, %v505
      %v520 = vpack.c.b16 %v508, %v507
      %v521 = vpack.c.b16 %v510, %v509
      %v522 = vpack.c.b16 %v512, %v511
      %v523 = vpack.c.b16 %v514, %v513
      %v524 = vpack.c.b16 %v516, %v515
      %533 = vmatprep.subr.bf16.mxu0 0
      %534 = vmatpush1.bf16.msra.mxu0 %v517
      %535 = vmatprep.subr.bf16.mxu0 0
      %536 = vmatpush1.bf16.msra.mxu0 %v518
      %537 = vmatprep.subr.bf16.mxu0 0
      %538 = vmatpush1.bf16.msra.mxu0 %v519
      %539 = vmatprep.subr.bf16.mxu0 0
      %540 = vmatpush1.bf16.msra.mxu0 %v520
      %541 = vmatprep.subr.bf16.mxu0 0
      %542 = vmatpush1.bf16.msra.mxu0 %v521
      %543 = vmatprep.subr.bf16.mxu0 0
      %544 = vmatpush1.bf16.msra.mxu0 %v522
      %545 = vmatprep.subr.bf16.mxu0 0
      %546 = vmatpush1.bf16.msra.mxu0 %v523
      %547 = vmatprep.subr.bf16.mxu0 0
      %548 = vmatpush1.bf16.msra.mxu0 %v524
      %549 = vmatprep.subr.bf16.mxu0 0
      %550 = vmatpush1.bf16.msra.mxu0 0
      %551 = vmatprep.subr.bf16.mxu0 0
      %552 = vmatpush1.bf16.msra.mxu0 0
      %553 = vmatprep.subr.bf16.mxu0 0
      %554 = vmatpush1.bf16.msra.mxu0 0
      %555 = vmatprep.subr.bf16.mxu0 0
      %556 = vmatpush1.bf16.msra.mxu0 0
      %557 = vmatprep.subr.bf16.mxu0 0
      %558 = vmatpush1.bf16.msra.mxu0 0
      %559 = vmatprep.subr.bf16.mxu0 0
      %560 = vmatpush1.bf16.msra.mxu0 0
      %561 = vmatprep.subr.bf16.mxu0 0
      %562 = vmatpush1.bf16.msra.mxu0 0
      %563 = vmatprep.subr.bf16.mxu0 0
      %564 = vmatpush1.bf16.msra.mxu0 0
      %565 = vmatprep.mubr.bf16.mxu0 0
      %566 = vmatmul.mubr.bf16.gmra.mrb[0].mxu0 %v468
      %v567 = vpop.f32.mrb[0].mxu0
      %v568 = vadd.f32 0.0, %v567
      %v569 = vpop.f32.mrb[0].mxu0
      %v570 = vpop.f32.mrb[0].mxu0
      %v571 = vpop.f32.mrb[0].mxu0
      %572 = vdwg.mxu0
      %v573 = vadd.f32 %v467, %v568
      %574 = vst [vmem:[#allocation2] sm:$0xff] %v573
      // Predicated region
      $region53: #{poswise_ffn.1} parent=47 // pred_check
        %p575 = pneg %p340
      $region54: #{poswise_ffn.1} parent=47 // pred_check_branch
        %577 = sbr.rel (%p575) target = $region56
      $region55: #{poswise_ffn.1} parent=47 // pred_region
        %v578 = vld [vmem:[#allocation2] sm:$0xff]
        %v579 = vld [vmem:[%s4] sm:$0x1]
        %v581 = vlaneseq
        %v582 = vshrl.u32 %v581, 7
        %v583 = vsub.s32 0, %v582
        %v584 = vrot.slane %v579, %v583
        %v586 = vadd.f32 %v578, %v584
        %v587 = vld [vmem:[%s321] sm:$0xff]
        %v588 = vadd.f32 %v586, %v587
        %v589 = vlaneseq
        %v590 = vand.u32 %v589, 127
        %vm591 = vcmp.lt.s32.totalorder %v590, 32
        %v592 = vsel %vm591, 1, 0
        %v593 = vcvt.s32.f32 %v592
        %v594 = vmul.f32 %v588, %v593
        %595 = vadd.xlane.f32.xlu0 %v594
        %v596 = vpop.xlane.xlu0 %595
        %v597 = vmul.f32 %v596, 0.03125
        %v598 = vsub.f32 %v594, %v597
        %v599 = vmul.f32 %v598, %v593
        %v600 = vmul.f32 %v599, %v599
        %601 = vadd.xlane.f32.xlu0 %v600
        %v602 = vpop.xlane.xlu0 %601
        %v603 = vmul.f32 %v602, 0.03125
        %v604 = vadd.f32 %v603, 1e-05
        %v605 = vrsqrt.pop %v604
        %v606 = vmul.f32 %v599, %v605
        %v607 = vld [vmem:[%s5] sm:$0x1]
        %v609 = vlaneseq
        %v610 = vshrl.u32 %v609, 7
        %v611 = vsub.s32 0, %v610
        %v612 = vrot.slane %v607, %v611
        %v614 = vmul.f32 %v606, %v612
        %v615 = vld [vmem:[%s6] sm:$0x1]
        %v617 = vlaneseq
        %v618 = vshrl.u32 %v617, 7
        %v619 = vsub.s32 0, %v618
        %v620 = vrot.slane %v615, %v619
        %v622 = vadd.f32 %v614, %v620
        %623 = vst [vmem:[%s338] sm:$0xff] %v622
      $region56: #{poswise_ffn.1} parent=47 // pred_fallthru
        _
      %p624 = scmp.lt.s32.totalorder %s22, 1
      %s625 = scalar_select %p624, %s22, 1
      %s626 = smul.addr %s625, 8
      %s627 = scalar_lea.vmem %s7, %s626
      // Predicated region
      $region57: #{poswise_ffn.1} parent=47 // pred_check
        %p628 = pneg %p215
      $region58: #{poswise_ffn.1} parent=47 // pred_check_branch
        %630 = sbr.rel (%p628) target = $region60
      $region59: #{poswise_ffn.1} parent=47 // pred_region
        _
      $region60: #{poswise_ffn.1} parent=47 // pred_fallthru
        _
    $region48: #{poswise_ffn.1} parent=5 // pred_fallthru
      _
    %p631 = scmp.le.s32.totalorder 2, %s13
    // Predicated region
    $region61: #{poswise_ffn.1} parent=5 // pred_check
      %p632 = pneg %p631
    $region62: #{poswise_ffn.1} parent=5 // pred_check_branch
      %634 = sbr.rel (%p632) target = $region64
    $region63: #{poswise_ffn.1} parent=5 // pred_region
      %s635 = ssub.s32 %s13, 2
      // Predicated region
      $region65: #{poswise_ffn.1} parent=63 // pred_check
        %p636 = pneg %p221
      $region66: #{poswise_ffn.1} parent=63 // pred_check_branch
        %638 = sbr.rel (%p636) target = $region68
      $region67: #{poswise_ffn.1} parent=63 // pred_region
        %p639 = scmp.lt.s32.totalorder %s24, 1
        %s640 = scalar_select %p639, %s24, 1
        %s641 = smul.addr %s640, 8
        %s642 = scalar_lea.vmem %s7, %s641
      $region68: #{poswise_ffn.1} parent=63 // pred_fallthru
        _
    $region64: #{poswise_ffn.1} parent=5 // pred_fallthru
      _
  $region6: #{poswise_ffn.1} parent=0 // loop_footer
    %s17 = sadd.s32 1, %s13
  $region7: #{poswise_ffn.1} parent=0 // loop_footer_branch
    %12 = sbr.rel target = $region3
  $region8: #{poswise_ffn.1} parent=0 // loop_exit
    _

</llo_original>
